<compile_context>
chip_gen: v6e
topology: v6e:2x2x1
jax: 0.10.0
libtpu: 0.0.40
codegen_flags: <defaults>
</compile_context>

<pallas_src>
import functools

import jax
import jax.numpy as jnp
from jax.experimental import pallas as pl
from jax.experimental.pallas import tpu as pltpu


def _round_up(x, m):
    return ((x + m - 1) // m) * m


def _gaussian_mlp_kernel(action_dim,
                         x_ref, noise_ref,
                         w1_ref, b1_ref, w2_ref, b2_ref,
                         wh_ref, bh_ref,
                         out_ref):
    compute_dtype = w1_ref.dtype
    A = action_dim

    # Hidden layer 1: Linear -> ReLU   (hidden_activation = F.relu)
    x = x_ref[...].astype(compute_dtype)          # in-kernel cast (VPU, hidden)
    h = jnp.dot(x, w1_ref[...], preferred_element_type=jnp.float32) + b1_ref[...]
    h = jnp.maximum(h, 0.0).astype(compute_dtype)

    # Hidden layer 2: Linear -> ReLU
    h = jnp.dot(h, w2_ref[...], preferred_element_type=jnp.float32) + b2_ref[...]
    h = jnp.maximum(h, 0.0).astype(compute_dtype)

    # Fused last_fc head (output_activation = identity):
    # columns [0:A] = mean, [A:2A] = log_std.
    head = jnp.dot(h, wh_ref[...], preferred_element_type=jnp.float32) + bh_ref[...]
    means = head[:, :A]
    log_stds = head[:, A:]

    # log_std intentionally un-clamped: matches the reference module exactly.
    stds = jnp.exp(log_stds)
    # Normal(mean, std).sample() == mean + std * eps,  eps ~ N(0, 1)
    samples = means + stds * noise_ref[...]

    # Lane-0-aligned stores into a single (3, tb, A) output plane stack.
    out_ref[0] = samples.astype(out_ref.dtype)
    out_ref[1] = means.astype(out_ref.dtype)
    out_ref[2] = log_stds.astype(out_ref.dtype)


def prepare_params(params, use_bf16=True):
    """One-time (outside hot path) param prep: cast matmul weights to bf16 and
    fuse the mean / log_std heads into a single [h2, 2A] weight / [1, 2A] bias."""
    w1, b1, w2, b2, wm, bm, ws, bs = params
    cdt = jnp.bfloat16 if use_bf16 else w1.dtype
    wh = jnp.concatenate([wm, ws], axis=1).astype(cdt)
    bh = jnp.concatenate([bm, bs], axis=1).astype(jnp.float32)
    return (w1.astype(cdt), b1.astype(jnp.float32),
            w2.astype(cdt), b2.astype(jnp.float32),
            wh, bh)


def gaussian_mlp_policy_forward(obs, prepared_params, noise, action_dim,
                                *, block_b=4096):
    """Returns (samples, info) like GaussianMlpPolicy.forward.

    info contains 'mean' and 'log_std'.
    """
    w1, b1, w2, b2, wh, bh = prepared_params
    B, obs_dim = obs.shape
    A = action_dim
    h1 = w1.shape[1]
    h2 = w2.shape[1]

    # Batch tile: big enough to amortize the ~0.35us per-step fixed cost, but
    # (for B > 16) capped so the grid has >= 2 steps for v7x's two TCs.
    if B <= 16:
        tb = B                                            # single full-batch step
    else:
        tb = min(block_b, _round_up(pl.cdiv(B, 2), 8))
    grid = (pl.cdiv(B, tb),)

    batch_map = lambda i: (i, 0)
    const_map = lambda i: (0, 0)
    out_map = lambda i: (0, i, 0)

    grid_spec = pltpu.PrefetchScalarGridSpec(
        num_scalar_prefetch=0,
        grid=grid,
        in_specs=[
            pl.BlockSpec((tb, obs_dim), batch_map),       # obs tile (f32, cast in kernel)
            pl.BlockSpec((tb, A), batch_map),             # noise tile
            # Weights/biases: constant index_map -> DMA'd once, VMEM-resident.
            # TODO(synk): on v7x with large hidden sizes, add
            # pipeline_mode=pl.Buffered(1) to single-buffer resident weights.
            pl.BlockSpec((obs_dim, h1), const_map),       # w1
            pl.BlockSpec((1, h1), const_map),             # b1
            pl.BlockSpec((h1, h2), const_map),            # w2
            pl.BlockSpec((1, h2), const_map),             # b2
            pl.BlockSpec((h2, 2 * A), const_map),         # fused head weight [mean|log_std]
            pl.BlockSpec((1, 2 * A), const_map),          # fused head bias
        ],
        out_specs=pl.BlockSpec((3, tb, A), out_map),
    )

    out = pl.pallas_call(
        functools.partial(_gaussian_mlp_kernel, A),
        out_shape=jax.ShapeDtypeStruct((3, B, A), jnp.float32),
        grid_spec=grid_spec,
        compiler_params=pltpu.CompilerParams(
            dimension_semantics=("parallel",),
            vmem_limit_bytes=32 * 1024 * 1024,
        ),
    )(obs, noise, w1, b1, w2, b2, wh, bh)

    samples = out[0]
    info = dict(mean=out[1], log_std=out[2])
    # TODO(synk): the torch Normal distribution object in info['dist'] has no
    # array equivalent; mean/log_std fully parameterize it and its .sample()
    # is reproduced in-kernel via the supplied N(0,1) noise.
    return samples, info


def init_params(key, obs_dim, hidden_sizes, action_dim,
                init_w=0.003, b_init_value=0.1):
    """Matches rlkit's Mlp.__init__:
       - hidden weights: fanin_init (uniform +- 1/sqrt(fan_in))
       - hidden biases:  filled with b_init_value (0.1)
       - last_fc weight & bias: uniform(-init_w, init_w), split into the mean
         and log_std heads (rows 0:A and A:2A of the PyTorch weight).
    Weights returned as [in, out] (transposed from PyTorch)."""
    h1, h2 = hidden_sizes
    k1, k2, k3, k4, k5, k6 = jax.random.split(key, 6)

    bound1 = 1.0 / jnp.sqrt(obs_dim)
    w1 = jax.random.uniform(k1, (obs_dim, h1), jnp.float32, -bound1, bound1)
    b1 = jnp.full((1, h1), b_init_value, jnp.float32)

    bound2 = 1.0 / jnp.sqrt(h1)
    w2 = jax.random.uniform(k2, (h1, h2), jnp.float32, -bound2, bound2)
    b2 = jnp.full((1, h2), b_init_value, jnp.float32)

    wm = jax.random.uniform(k3, (h2, action_dim), jnp.float32, -init_w, init_w)
    bm = jax.random.uniform(k4, (1, action_dim), jnp.float32, -init_w, init_w)
    ws = jax.random.uniform(k5, (h2, action_dim), jnp.float32, -init_w, init_w)
    bs = jax.random.uniform(k6, (1, action_dim), jnp.float32, -init_w, init_w)

    return (w1, b1, w2, b2, wm, bm, ws, bs)


if __name__ == "__main__":
    obs_dim = 16
    action_dim = 4
    hidden_sizes = (32, 32)
    batch = 32   # > 16 -> grid of 2 steps, exercises the batch-tiled path

    key = jax.random.PRNGKey(0)
    k_params, k_obs, k_noise = jax.random.split(key, 3)

    params = init_params(k_params, obs_dim, hidden_sizes, action_dim)
    prepared = prepare_params(params, use_bf16=True)   # one-time, outside hot path

    obs = jax.random.normal(k_obs, (batch, obs_dim), jnp.float32)
    # N(0,1) noise used by the in-kernel Normal(mean, std).sample().
    # TODO(synk): optionally generate eps in-kernel (pltpu.prng_seed +
    # pltpu.stateful_normal) to drop the noise HBM stream when bit-exact
    # external noise is not required.
    noise = jax.random.normal(k_noise, (batch, action_dim), jnp.float32)

    samples, info = gaussian_mlp_policy_forward(obs, prepared, noise, action_dim)
    jax.block_until_ready((samples, info["mean"], info["log_std"]))

    # Pure-JAX reference with the same bf16 quantization of MXU operands.
    w1, b1, w2, b2, wm, bm, ws, bs = params

    def q(x):  # bf16-quantize, compute in f32 (matches bf16 MXU + f32 acc)
        return x.astype(jnp.bfloat16).astype(jnp.float32)

    h = jnp.maximum(q(obs) @ q(w1) + b1, 0.0)
    h = jnp.maximum(q(h) @ q(w2) + b2, 0.0)
    ref_means = q(h) @ q(wm) + bm
    ref_logstd = q(h) @ q(ws) + bs
    ref_samples = ref_means + jnp.exp(ref_logstd) * noise

    assert jnp.allclose(info["mean"], ref_means, atol=1e-4), "mean mismatch"
    assert jnp.allclose(info["log_std"], ref_logstd, atol=1e-4), "log_std mismatch"
    assert jnp.allclose(samples, ref_samples, atol=1e-4), "sample mismatch"

    print("KERNEL_OK")
</pallas_src>

<mosaic_0001>
module attributes {stable_mosaic.version = 11 : i64} {
  func.func @_gaussian_mlp_kernel(%arg0: i32, %arg1: memref<16x16xf32, #tpu.memory_space<vmem>>, %arg2: memref<16x4xf32, #tpu.memory_space<vmem>>, %arg3: memref<16x32xbf16, #tpu.memory_space<vmem>>, %arg4: memref<1x32xf32, #tpu.memory_space<vmem>>, %arg5: memref<32x32xbf16, #tpu.memory_space<vmem>>, %arg6: memref<1x32xf32, #tpu.memory_space<vmem>>, %arg7: memref<32x8xbf16, #tpu.memory_space<vmem>>, %arg8: memref<1x8xf32, #tpu.memory_space<vmem>>, %arg9: memref<3x16x4xf32, #tpu.memory_space<vmem>>) attributes {dimension_semantics = [#tpu.dimension_semantics<parallel>], iteration_bounds = array<i64: 2>, scalar_prefetch = 0 : i64, scratch_operands = 0 : i64, tpu.core_type = #tpu.core_type<tc>, window_params = [{transform_indices = @transform_0, window_bounds = array<i64: 16, 16>}, {transform_indices = @transform_1, window_bounds = array<i64: 16, 4>}, {pipeline_mode = #tpu.pipeline_mode<synchronous>, transform_indices = @transform_2, window_bounds = array<i64: 16, 32>}, {pipeline_mode = #tpu.pipeline_mode<synchronous>, transform_indices = @transform_3, window_bounds = array<i64: 1, 32>}, {pipeline_mode = #tpu.pipeline_mode<synchronous>, transform_indices = @transform_4, window_bounds = array<i64: 32, 32>}, {pipeline_mode = #tpu.pipeline_mode<synchronous>, transform_indices = @transform_5, window_bounds = array<i64: 1, 32>}, {pipeline_mode = #tpu.pipeline_mode<synchronous>, transform_indices = @transform_6, window_bounds = array<i64: 32, 8>}, {pipeline_mode = #tpu.pipeline_mode<synchronous>, transform_indices = @transform_7, window_bounds = array<i64: 1, 8>}, {transform_indices = @transform_8, window_bounds = array<i64: 3, 16, 4>}]} {
    %c0 = arith.constant 0 : index
    %c0_0 = arith.constant 0 : index
    %0 = vector.load %arg1[%c0, %c0_0] : memref<16x16xf32, #tpu.memory_space<vmem>>, vector<16x16xf32>
    %1 = arith.truncf %0 : vector<16x16xf32> to vector<16x16xbf16>
    %c0_1 = arith.constant 0 : index
    %c0_2 = arith.constant 0 : index
    %2 = vector.load %arg3[%c0_1, %c0_2] : memref<16x32xbf16, #tpu.memory_space<vmem>>, vector<16x32xbf16>
    %cst = arith.constant dense<0.000000e+00> : vector<16x32xf32>
    %3 = tpu.matmul %1, %2, %cst {dimension_numbers = #tpu.dot_dimension_numbers<[1], [0], [0], [1], [0, 0, 1, 1], [], []>} : vector<16x16xbf16>, vector<16x32xbf16>, vector<16x32xf32> -> vector<16x32xf32>
    %c0_3 = arith.constant 0 : index
    %c0_4 = arith.constant 0 : index
    %4 = vector.load %arg4[%c0_3, %c0_4] : memref<1x32xf32, #tpu.memory_space<vmem>>, vector<1x32xf32>
    %5 = vector.broadcast %4 : vector<1x32xf32> to vector<16x32xf32>
    %6 = arith.addf %3, %5 : vector<16x32xf32>
    %cst_5 = arith.constant 0.000000e+00 : f32
    %7 = vector.broadcast %cst_5 : f32 to vector<16x32xf32>
    %8 = arith.maximumf %6, %7 : vector<16x32xf32>
    %9 = arith.truncf %8 : vector<16x32xf32> to vector<16x32xbf16>
    %c0_6 = arith.constant 0 : index
    %c0_7 = arith.constant 0 : index
    %10 = vector.load %arg5[%c0_6, %c0_7] : memref<32x32xbf16, #tpu.memory_space<vmem>>, vector<32x32xbf16>
    %cst_8 = arith.constant dense<0.000000e+00> : vector<16x32xf32>
    %11 = tpu.matmul %9, %10, %cst_8 {dimension_numbers = #tpu.dot_dimension_numbers<[1], [0], [0], [1], [0, 0, 1, 1], [], []>} : vector<16x32xbf16>, vector<32x32xbf16>, vector<16x32xf32> -> vector<16x32xf32>
    %c0_9 = arith.constant 0 : index
    %c0_10 = arith.constant 0 : index
    %12 = vector.load %arg6[%c0_9, %c0_10] : memref<1x32xf32, #tpu.memory_space<vmem>>, vector<1x32xf32>
    %13 = vector.broadcast %12 : vector<1x32xf32> to vector<16x32xf32>
    %14 = arith.addf %11, %13 : vector<16x32xf32>
    %cst_11 = arith.constant 0.000000e+00 : f32
    %15 = vector.broadcast %cst_11 : f32 to vector<16x32xf32>
    %16 = arith.maximumf %14, %15 : vector<16x32xf32>
    %17 = arith.truncf %16 : vector<16x32xf32> to vector<16x32xbf16>
    %c0_12 = arith.constant 0 : index
    %c0_13 = arith.constant 0 : index
    %18 = vector.load %arg7[%c0_12, %c0_13] : memref<32x8xbf16, #tpu.memory_space<vmem>>, vector<32x8xbf16>
    %cst_14 = arith.constant dense<0.000000e+00> : vector<16x8xf32>
    %19 = tpu.matmul %17, %18, %cst_14 {dimension_numbers = #tpu.dot_dimension_numbers<[1], [0], [0], [1], [0, 0, 1, 1], [], []>} : vector<16x32xbf16>, vector<32x8xbf16>, vector<16x8xf32> -> vector<16x8xf32>
    %c0_15 = arith.constant 0 : index
    %c0_16 = arith.constant 0 : index
    %20 = vector.load %arg8[%c0_15, %c0_16] : memref<1x8xf32, #tpu.memory_space<vmem>>, vector<1x8xf32>
    %21 = vector.broadcast %20 : vector<1x8xf32> to vector<16x8xf32>
    %22 = arith.addf %19, %21 : vector<16x8xf32>
    %23 = vector.extract_strided_slice %22 {offsets = [0, 0], sizes = [16, 4], strides = [1, 1]} : vector<16x8xf32> to vector<16x4xf32>
    %24 = vector.extract_strided_slice %22 {offsets = [0, 4], sizes = [16, 4], strides = [1, 1]} : vector<16x8xf32> to vector<16x4xf32>
    %25 = math.exp %24 : vector<16x4xf32>
    %c0_17 = arith.constant 0 : index
    %c0_18 = arith.constant 0 : index
    %26 = vector.load %arg2[%c0_17, %c0_18] : memref<16x4xf32, #tpu.memory_space<vmem>>, vector<16x4xf32>
    %27 = arith.mulf %25, %26 : vector<16x4xf32>
    %28 = arith.addf %23, %27 : vector<16x4xf32>
    %c0_19 = arith.constant 0 : index
    %c0_20 = arith.constant 0 : index
    %c0_21 = arith.constant 0 : index
    %29 = vector.load %arg9[%c0_19, %c0_20, %c0_21] : memref<3x16x4xf32, #tpu.memory_space<vmem>>, vector<1x16x4xf32>
    %30 = vector.shape_cast %29 : vector<1x16x4xf32> to vector<16x4xf32>
    %31 = vector.shape_cast %28 : vector<16x4xf32> to vector<1x16x4xf32>
    tpu.vector_store %arg9[%c0_19, %c0_20, %c0_21], %31 {strides = array<i32>} : memref<3x16x4xf32, #tpu.memory_space<vmem>>, vector<1x16x4xf32>,
    %c1 = arith.constant 1 : index
    %c0_22 = arith.constant 0 : index
    %c0_23 = arith.constant 0 : index
    %32 = vector.load %arg9[%c1, %c0_22, %c0_23] : memref<3x16x4xf32, #tpu.memory_space<vmem>>, vector<1x16x4xf32>
    %33 = vector.shape_cast %32 : vector<1x16x4xf32> to vector<16x4xf32>
    %34 = vector.shape_cast %23 : vector<16x4xf32> to vector<1x16x4xf32>
    tpu.vector_store %arg9[%c1, %c0_22, %c0_23], %34 {strides = array<i32>} : memref<3x16x4xf32, #tpu.memory_space<vmem>>, vector<1x16x4xf32>,
    %c2 = arith.constant 2 : index
    %c0_24 = arith.constant 0 : index
    %c0_25 = arith.constant 0 : index
    %35 = vector.load %arg9[%c2, %c0_24, %c0_25] : memref<3x16x4xf32, #tpu.memory_space<vmem>>, vector<1x16x4xf32>
    %36 = vector.shape_cast %35 : vector<1x16x4xf32> to vector<16x4xf32>
    %37 = vector.shape_cast %24 : vector<16x4xf32> to vector<1x16x4xf32>
    tpu.vector_store %arg9[%c2, %c0_24, %c0_25], %37 {strides = array<i32>} : memref<3x16x4xf32, #tpu.memory_space<vmem>>, vector<1x16x4xf32>,
    return
  }
  func.func @transform_0(%arg0: i32) -> (i32, i32) {
    %c0_i32 = arith.constant 0 : i32
    %c0_i32_0 = arith.constant 0 : i32
    return %arg0, %c0_i32 : i32, i32
  }
  func.func @transform_1(%arg0: i32) -> (i32, i32) {
    %c0_i32 = arith.constant 0 : i32
    %c0_i32_0 = arith.constant 0 : i32
    return %arg0, %c0_i32 : i32, i32
  }
  func.func @transform_2(%arg0: i32) -> (i32, i32) {
    %c0_i32 = arith.constant 0 : i32
    %c0_i32_0 = arith.constant 0 : i32
    %c0_i32_1 = arith.constant 0 : i32
    return %c0_i32, %c0_i32_0 : i32, i32
  }
  func.func @transform_3(%arg0: i32) -> (i32, i32) {
    %c0_i32 = arith.constant 0 : i32
    %c0_i32_0 = arith.constant 0 : i32
    %c0_i32_1 = arith.constant 0 : i32
    return %c0_i32, %c0_i32_0 : i32, i32
  }
  func.func @transform_4(%arg0: i32) -> (i32, i32) {
    %c0_i32 = arith.constant 0 : i32
    %c0_i32_0 = arith.constant 0 : i32
    %c0_i32_1 = arith.constant 0 : i32
    return %c0_i32, %c0_i32_0 : i32, i32
  }
  func.func @transform_5(%arg0: i32) -> (i32, i32) {
    %c0_i32 = arith.constant 0 : i32
    %c0_i32_0 = arith.constant 0 : i32
    %c0_i32_1 = arith.constant 0 : i32
    return %c0_i32, %c0_i32_0 : i32, i32
  }
  func.func @transform_6(%arg0: i32) -> (i32, i32) {
    %c0_i32 = arith.constant 0 : i32
    %c0_i32_0 = arith.constant 0 : i32
    %c0_i32_1 = arith.constant 0 : i32
    return %c0_i32, %c0_i32_0 : i32, i32
  }
  func.func @transform_7(%arg0: i32) -> (i32, i32) {
    %c0_i32 = arith.constant 0 : i32
    %c0_i32_0 = arith.constant 0 : i32
    %c0_i32_1 = arith.constant 0 : i32
    return %c0_i32, %c0_i32_0 : i32, i32
  }
  func.func @transform_8(%arg0: i32) -> (i32, i32, i32) {
    %c0_i32 = arith.constant 0 : i32
    %c0_i32_0 = arith.constant 0 : i32
    %c0_i32_1 = arith.constant 0 : i32
    return %c0_i32, %arg0, %c0_i32_0 : i32, i32, i32
  }
}

</mosaic_0001>

<llo_original>
// kernel: tpu_custom_call.1
$region0: #{tpu_custom_call.1}
  #allocation0 [shape = 'u32[]', space=smem, size = 0x4, offset = 0x4, fixed_abs, tag = 'smem constant byte address 0x4 - core index']
  #allocation1 [shape = 'u32[144,128]{1,0:T(1,128)}', space=vmem, size = 0x12000, scoped, tag = 'internal scratch']
  %s0 = inlined_call_operand.vmem [shape: f32[32,16], index: 0, kind: input, shape index: {}]
  %s1 = inlined_call_operand.vmem [shape: f32[32,4], index: 1, kind: input, shape index: {}]
  %s2 = inlined_call_operand.vmem [shape: bf16[16,32], index: 2, kind: input, shape index: {}]
  %s3 = inlined_call_operand.vmem [shape: f32[1,32], index: 3, kind: input, shape index: {}]
  %s4 = inlined_call_operand.vmem [shape: bf16[32,32], index: 4, kind: input, shape index: {}]
  %s5 = inlined_call_operand.vmem [shape: f32[1,32], index: 5, kind: input, shape index: {}]
  %s6 = inlined_call_operand.vmem [shape: bf16[32,8], index: 6, kind: input, shape index: {}]
  %s7 = inlined_call_operand.vmem [shape: f32[1,8], index: 7, kind: input, shape index: {}]
  %s8 = inlined_call_operand.vmem [shape: f32[3,32,4], index: 8, kind: output, shape index: {}]
  %s9 = sld [smem:[#allocation0]]
  $region99: #{tpu_custom_call.1} parent=0
    _
  %s11 = ssub.s32 1, %s9
  %s12 = scalar_select 0, %s11, %s9
  $region1: #{tpu_custom_call.1} parent=0
    #allocation2 [shape = 'u8[49152]{0}', space=vmem, size = 0xc000, scoped, tag = 'output window, operand 0']
    loop: start=0, step=1, limit=4
    $region2: #{tpu_custom_call.1} parent=1 // loop_pre_header
      _
    $region3: #{tpu_custom_call.1} parent=1 // loop_header
      %s14 = sphi 0, %s18
      %p15 = scmp.ge.s32.totalorder %s14, 4
      %s24 = sphi 0, %s26
      %s27 = sphi 0, %s24
      %s28 = sphi 0, %s27
      %s44 = sphi 0, %s28
      %s50 = sphi 0, %s52
      %s53 = sphi 0, %s50
      %s54 = sphi 0, %s53
      %s70 = sphi 0, %s54
      %s74 = sphi 0, %s74
      %s76 = sphi 0, %s74
      %s77 = sphi 0, %s76
      %s91 = sphi 0, %s77
      %s95 = sphi 0, %s95
      %s97 = sphi 0, %s95
      %s98 = sphi 0, %s97
      %s112 = sphi 0, %s98
      %s116 = sphi 0, %s116
      %s118 = sphi 0, %s116
      %s119 = sphi 0, %s118
      %s133 = sphi 0, %s119
      %s137 = sphi 0, %s137
      %s139 = sphi 0, %s137
      %s140 = sphi 0, %s139
      %s154 = sphi 0, %s140
      %s158 = sphi 0, %s158
      %s160 = sphi 0, %s158
      %s161 = sphi 0, %s160
      %s175 = sphi 0, %s161
      %s179 = sphi 0, %s179
      %s181 = sphi 0, %s179
      %s182 = sphi 0, %s181
      %s196 = sphi 0, %s182
      %s202 = sphi 0, %s204
      %s205 = sphi 0, %s202
      %s206 = sphi 0, %s205
      %s222 = sphi 0, %s206
    $region4: #{tpu_custom_call.1} parent=1 // loop_header_branch
      %17 = sbr.rel (%p15) target = $region8
    $region5: #{tpu_custom_call.1} parent=1 // loop_body
      %s19 = ssub.s32 %s14, 1
      %s20 = ssub.s32 %s14, 2
      %s21 = sadd.s32 %s14, 1
      %s22 = ssub.s32 %s14, %s21
      %p23 = scmp.eq.s32.totalorder %s22, 0
      %s25 = sadd.s32 %s24, 1
      %s26 = scalar_select %p23, %s24, %s25
      %p29 = pneg %p23
      %p30 = scmp.eq.s32.totalorder %s14, 1
      %p31 = por %p29, %p30
      %p32 = scmp.ne.s32.totalorder %s24, %s27
      %p33 = scmp.eq.s32.totalorder %s14, 0
      %p34 = por %p32, %p33
      %p35 = scmp.ne.s32.totalorder %s24, %s27
      %p36 = scmp.eq.s32.totalorder %s19, 1
      %p37 = por %p35, %p36
      %p38 = scmp.ne.s32.totalorder %s27, %s28
      %p39 = scmp.eq.s32.totalorder %s19, 0
      %p40 = por %p38, %p39
      %p41 = scmp.ne.s32.totalorder %s27, %s28
      %p42 = scmp.eq.s32.totalorder %s20, 1
      %p43 = por %p41, %p42
      %p45 = scmp.ne.s32.totalorder %s28, %s44
      %p46 = scmp.eq.s32.totalorder %s20, 0
      %p47 = por %p45, %p46
      %s48 = ssub.s32 %s14, %s21
      %p49 = scmp.eq.s32.totalorder %s48, 0
      %s51 = sadd.s32 %s50, 1
      %s52 = scalar_select %p49, %s50, %s51
      %p55 = pneg %p49
      %p56 = scmp.eq.s32.totalorder %s14, 1
      %p57 = por %p55, %p56
      %p58 = scmp.ne.s32.totalorder %s50, %s53
      %p59 = scmp.eq.s32.totalorder %s14, 0
      %p60 = por %p58, %p59
      %p61 = scmp.ne.s32.totalorder %s50, %s53
      %p62 = scmp.eq.s32.totalorder %s19, 1
      %p63 = por %p61, %p62
      %p64 = scmp.ne.s32.totalorder %s53, %s54
      %p65 = scmp.eq.s32.totalorder %s19, 0
      %p66 = por %p64, %p65
      %p67 = scmp.ne.s32.totalorder %s53, %s54
      %p68 = scmp.eq.s32.totalorder %s20, 1
      %p69 = por %p67, %p68
      %p71 = scmp.ne.s32.totalorder %s54, %s70
      %p72 = scmp.eq.s32.totalorder %s20, 0
      %p73 = por %p71, %p72
      %s75 = sadd.s32 %s74, 1
      %p78 = scmp.eq.s32.totalorder %s14, 1
      %p79 = scmp.ne.s32.totalorder %s74, %s76
      %p80 = scmp.eq.s32.totalorder %s14, 0
      %p81 = por %p79, %p80
      %p82 = scmp.ne.s32.totalorder %s74, %s76
      %p83 = scmp.eq.s32.totalorder %s19, 1
      %p84 = por %p82, %p83
      %p85 = scmp.ne.s32.totalorder %s76, %s77
      %p86 = scmp.eq.s32.totalorder %s19, 0
      %p87 = por %p85, %p86
      %p88 = scmp.ne.s32.totalorder %s76, %s77
      %p89 = scmp.eq.s32.totalorder %s20, 1
      %p90 = por %p88, %p89
      %p92 = scmp.ne.s32.totalorder %s77, %s91
      %p93 = scmp.eq.s32.totalorder %s20, 0
      %p94 = por %p92, %p93
      %s96 = sadd.s32 %s95, 1
      %p99 = scmp.eq.s32.totalorder %s14, 1
      %p100 = scmp.ne.s32.totalorder %s95, %s97
      %p101 = scmp.eq.s32.totalorder %s14, 0
      %p102 = por %p100, %p101
      %p103 = scmp.ne.s32.totalorder %s95, %s97
      %p104 = scmp.eq.s32.totalorder %s19, 1
      %p105 = por %p103, %p104
      %p106 = scmp.ne.s32.totalorder %s97, %s98
      %p107 = scmp.eq.s32.totalorder %s19, 0
      %p108 = por %p106, %p107
      %p109 = scmp.ne.s32.totalorder %s97, %s98
      %p110 = scmp.eq.s32.totalorder %s20, 1
      %p111 = por %p109, %p110
      %p113 = scmp.ne.s32.totalorder %s98, %s112
      %p114 = scmp.eq.s32.totalorder %s20, 0
      %p115 = por %p113, %p114
      %s117 = sadd.s32 %s116, 1
      %p120 = scmp.eq.s32.totalorder %s14, 1
      %p121 = scmp.ne.s32.totalorder %s116, %s118
      %p122 = scmp.eq.s32.totalorder %s14, 0
      %p123 = por %p121, %p122
      %p124 = scmp.ne.s32.totalorder %s116, %s118
      %p125 = scmp.eq.s32.totalorder %s19, 1
      %p126 = por %p124, %p125
      %p127 = scmp.ne.s32.totalorder %s118, %s119
      %p128 = scmp.eq.s32.totalorder %s19, 0
      %p129 = por %p127, %p128
      %p130 = scmp.ne.s32.totalorder %s118, %s119
      %p131 = scmp.eq.s32.totalorder %s20, 1
      %p132 = por %p130, %p131
      %p134 = scmp.ne.s32.totalorder %s119, %s133
      %p135 = scmp.eq.s32.totalorder %s20, 0
      %p136 = por %p134, %p135
      %s138 = sadd.s32 %s137, 1
      %p141 = scmp.eq.s32.totalorder %s14, 1
      %p142 = scmp.ne.s32.totalorder %s137, %s139
      %p143 = scmp.eq.s32.totalorder %s14, 0
      %p144 = por %p142, %p143
      %p145 = scmp.ne.s32.totalorder %s137, %s139
      %p146 = scmp.eq.s32.totalorder %s19, 1
      %p147 = por %p145, %p146
      %p148 = scmp.ne.s32.totalorder %s139, %s140
      %p149 = scmp.eq.s32.totalorder %s19, 0
      %p150 = por %p148, %p149
      %p151 = scmp.ne.s32.totalorder %s139, %s140
      %p152 = scmp.eq.s32.totalorder %s20, 1
      %p153 = por %p151, %p152
      %p155 = scmp.ne.s32.totalorder %s140, %s154
      %p156 = scmp.eq.s32.totalorder %s20, 0
      %p157 = por %p155, %p156
      %s159 = sadd.s32 %s158, 1
      %p162 = scmp.eq.s32.totalorder %s14, 1
      %p163 = scmp.ne.s32.totalorder %s158, %s160
      %p164 = scmp.eq.s32.totalorder %s14, 0
      %p165 = por %p163, %p164
      %p166 = scmp.ne.s32.totalorder %s158, %s160
      %p167 = scmp.eq.s32.totalorder %s19, 1
      %p168 = por %p166, %p167
      %p169 = scmp.ne.s32.totalorder %s160, %s161
      %p170 = scmp.eq.s32.totalorder %s19, 0
      %p171 = por %p169, %p170
      %p172 = scmp.ne.s32.totalorder %s160, %s161
      %p173 = scmp.eq.s32.totalorder %s20, 1
      %p174 = por %p172, %p173
      %p176 = scmp.ne.s32.totalorder %s161, %s175
      %p177 = scmp.eq.s32.totalorder %s20, 0
      %p178 = por %p176, %p177
      %s180 = sadd.s32 %s179, 1
      %p183 = scmp.eq.s32.totalorder %s14, 1
      %p184 = scmp.ne.s32.totalorder %s179, %s181
      %p185 = scmp.eq.s32.totalorder %s14, 0
      %p186 = por %p184, %p185
      %p187 = scmp.ne.s32.totalorder %s179, %s181
      %p188 = scmp.eq.s32.totalorder %s19, 1
      %p189 = por %p187, %p188
      %p190 = scmp.ne.s32.totalorder %s181, %s182
      %p191 = scmp.eq.s32.totalorder %s19, 0
      %p192 = por %p190, %p191
      %p193 = scmp.ne.s32.totalorder %s181, %s182
      %p194 = scmp.eq.s32.totalorder %s20, 1
      %p195 = por %p193, %p194
      %p197 = scmp.ne.s32.totalorder %s182, %s196
      %p198 = scmp.eq.s32.totalorder %s20, 0
      %p199 = por %p197, %p198
      %s200 = ssub.s32 %s14, %s21
      %p201 = scmp.eq.s32.totalorder %s200, 0
      %s203 = sadd.s32 %s202, 1
      %s204 = scalar_select %p201, %s202, %s203
      %p207 = pneg %p201
      %p208 = scmp.eq.s32.totalorder %s14, 1
      %p209 = por %p207, %p208
      %p210 = scmp.ne.s32.totalorder %s202, %s205
      %p211 = scmp.eq.s32.totalorder %s14, 0
      %p212 = por %p210, %p211
      %p213 = scmp.ne.s32.totalorder %s202, %s205
      %p214 = scmp.eq.s32.totalorder %s19, 1
      %p215 = por %p213, %p214
      %p216 = scmp.ne.s32.totalorder %s205, %s206
      %p217 = scmp.eq.s32.totalorder %s19, 0
      %p218 = por %p216, %p217
      %p219 = scmp.ne.s32.totalorder %s205, %s206
      %p220 = scmp.eq.s32.totalorder %s20, 1
      %p221 = por %p219, %p220
      %p223 = scmp.ne.s32.totalorder %s206, %s222
      %p224 = scmp.eq.s32.totalorder %s20, 0
      %p225 = por %p223, %p224
      %p226 = scmp.le.s32.totalorder 1, %s14
      %p227 = scmp.lt.s32.totalorder %s14, 3
      %p228 = pnand %p226, %p227
      %p229 = pneg %p228
      // Predicated region
      $region9: #{tpu_custom_call.1} parent=5 // pred_check
        _
      $region10: #{tpu_custom_call.1} parent=5 // pred_check_branch
        %231 = sbr.rel (%p228) target = $region12
      $region11: #{tpu_custom_call.1} parent=5 // pred_region
        %s232 = ssub.s32 %s14, 1
        // Predicated region
        $region13: #{tpu_custom_call.1} parent=11 // pred_check
          %p233 = pneg %p87
        $region14: #{tpu_custom_call.1} parent=11 // pred_check_branch
          %235 = sbr.rel (%p233) target = $region16
        $region15: #{tpu_custom_call.1} parent=11 // pred_region
          _
        $region16: #{tpu_custom_call.1} parent=11 // pred_fallthru
          _
        // Predicated region
        $region17: #{tpu_custom_call.1} parent=11 // pred_check
          %p236 = pneg %p108
        $region18: #{tpu_custom_call.1} parent=11 // pred_check_branch
          %238 = sbr.rel (%p236) target = $region20
        $region19: #{tpu_custom_call.1} parent=11 // pred_region
          _
        $region20: #{tpu_custom_call.1} parent=11 // pred_fallthru
          _
        // Predicated region
        $region21: #{tpu_custom_call.1} parent=11 // pred_check
          %p239 = pneg %p129
        $region22: #{tpu_custom_call.1} parent=11 // pred_check_branch
          %241 = sbr.rel (%p239) target = $region24
        $region23: #{tpu_custom_call.1} parent=11 // pred_region
          _
        $region24: #{tpu_custom_call.1} parent=11 // pred_fallthru
          _
        // Predicated region
        $region25: #{tpu_custom_call.1} parent=11 // pred_check
          %p242 = pneg %p150
        $region26: #{tpu_custom_call.1} parent=11 // pred_check_branch
          %244 = sbr.rel (%p242) target = $region28
        $region27: #{tpu_custom_call.1} parent=11 // pred_region
          _
        $region28: #{tpu_custom_call.1} parent=11 // pred_fallthru
          _
        // Predicated region
        $region29: #{tpu_custom_call.1} parent=11 // pred_check
          %p245 = pneg %p171
        $region30: #{tpu_custom_call.1} parent=11 // pred_check_branch
          %247 = sbr.rel (%p245) target = $region32
        $region31: #{tpu_custom_call.1} parent=11 // pred_region
          _
        $region32: #{tpu_custom_call.1} parent=11 // pred_fallthru
          _
        // Predicated region
        $region33: #{tpu_custom_call.1} parent=11 // pred_check
          %p248 = pneg %p192
        $region34: #{tpu_custom_call.1} parent=11 // pred_check_branch
          %250 = sbr.rel (%p248) target = $region36
        $region35: #{tpu_custom_call.1} parent=11 // pred_region
          _
        $region36: #{tpu_custom_call.1} parent=11 // pred_fallthru
          _
      $region12: #{tpu_custom_call.1} parent=5 // pred_fallthru
        _
      %p251 = scmp.lt.s32.totalorder %s14, 2
      // Predicated region
      $region37: #{tpu_custom_call.1} parent=5 // pred_check
        %p252 = pneg %p251
      $region38: #{tpu_custom_call.1} parent=5 // pred_check_branch
        %254 = sbr.rel (%p252) target = $region40
      $region39: #{tpu_custom_call.1} parent=5 // pred_region
        // Predicated region
        $region41: #{tpu_custom_call.1} parent=39 // pred_check
          %p255 = pneg %p34
        $region42: #{tpu_custom_call.1} parent=39 // pred_check_branch
          %257 = sbr.rel (%p255) target = $region44
        $region43: #{tpu_custom_call.1} parent=39 // pred_region
          %s258 = smul.u32 2, %s14
          %p259 = scmp.lt.s32.totalorder %s258, 3
          %s260 = scalar_select %p259, %s258, 3
          %s261 = smul.addr %s260, 8
          %s262 = scalar_lea.vmem %s0, %s261
          %s263 = smul.u32 2, %s14
        $region44: #{tpu_custom_call.1} parent=39 // pred_fallthru
          _
        // Predicated region
        $region45: #{tpu_custom_call.1} parent=39 // pred_check
          %p264 = pneg %p60
        $region46: #{tpu_custom_call.1} parent=39 // pred_check_branch
          %266 = sbr.rel (%p264) target = $region48
        $region47: #{tpu_custom_call.1} parent=39 // pred_region
          %s267 = smul.u32 2, %s14
          %p268 = scmp.lt.s32.totalorder %s267, 3
          %s269 = scalar_select %p268, %s267, 3
          %s270 = smul.addr %s269, 8
          %s271 = scalar_lea.vmem %s1, %s270
          %s272 = smul.u32 2, %s14
        $region48: #{tpu_custom_call.1} parent=39 // pred_fallthru
          _
      $region40: #{tpu_custom_call.1} parent=5 // pred_fallthru
        _
      %p273 = scmp.le.s32.totalorder 1, %s14
      %p274 = scmp.lt.s32.totalorder %s14, 3
      %p275 = pnand %p273, %p274
      %p276 = pneg %p275
      // Predicated region
      $region49: #{tpu_custom_call.1} parent=5 // pred_check
        _
      $region50: #{tpu_custom_call.1} parent=5 // pred_check_branch
        %278 = sbr.rel (%p275) target = $region52
      $region51: #{tpu_custom_call.1} parent=5 // pred_region
        %s279 = ssub.s32 %s14, 1
        %s280 = smul.u32 2, %s19
        %p281 = scmp.lt.s32.totalorder %s280, 3
        %s282 = scalar_select %p281, %s280, 3
        %s283 = smul.addr %s282, 8
        %s284 = scalar_lea.vmem %s0, %s283
        %p285 = pneg %p40
        %p286 = pneg %p37
        %s287 = smul.u32 2, %s19
        %p288 = scmp.lt.s32.totalorder %s287, 3
        %s289 = scalar_select %p288, %s287, 3
        %s290 = smul.addr %s289, 8
        %s291 = scalar_lea.vmem %s1, %s290
        %p292 = pneg %p66
        %p293 = pneg %p63
        %p294 = pneg %p87
        %p295 = pneg %p84
        %p296 = pneg %p108
        %p297 = pneg %p105
        %p298 = pneg %p129
        %p299 = pneg %p126
        %p300 = pneg %p150
        %p301 = pneg %p147
        %p302 = pneg %p171
        %p303 = pneg %p168
        %p304 = pneg %p192
        %p305 = pneg %p189
        %p306 = pneg %p218
        %p307 = pneg %p215
        %s308 = sand.u32 %s205, 1
        %s309 = sand.u32 %s205, 1
        %s310 = smul.addr %s309, 48
        %s311 = scalar_lea.vmem [#allocation2], %s310
        %s312 = smul.u32 2, %s19
        %p313 = scmp.lt.s32.totalorder %s312, 3
        %s314 = scalar_select %p313, %s312, 3
        %s315 = smul.addr %s314, 8
        %s316 = scalar_lea.vmem %s0, %s315
        %s317 = smul.u32 2, %s19
        %s318 = smul.u32 2, %s19
        %p319 = scmp.lt.s32.totalorder %s318, 3
        %s320 = scalar_select %p319, %s318, 3
        %s321 = smul.addr %s320, 8
        %s322 = scalar_lea.vmem %s1, %s321
        %s323 = smul.u32 2, %s19
        %s324 = smul.u32 2, %s19
        %v326 = vld [vmem:[%s316] sm:$0xff]
        %v327 = vld [vmem:[%s316 + $0x8] sm:$0xff]
        %v328 = vpack.c.bf16 %v327, %v326
        %v329 = vld [vmem:[%s2] sm:$0xf]
        %v330 = vld [vmem:[%s2 + $0x4] sm:$0xf]
        %v331 = vld [vmem:[%s3] sm:$0x1]
        %v333 = vlaneseq
        %v334 = vshrl.u32 %v333, 7
        %v335 = vsub.s32 0, %v334
        %v336 = vrot.slane %v331, %v335
        %v340 = vunpack.c.l.b16 %v329
        %v341 = vunpack.c.l.b16 %v330
        %v342 = vpack.c.b16 %v341, %v340
        %vm344 = vcmask 130048
        %v346 = vsel %vm344, %v328, 0
        %348 = vmatprep.subr.bf16.mxu0 0
        %349 = vmatpush1.bf16.msra.mxu0 0
        %350 = vmatprep.subr.bf16.mxu0 0
        %351 = vmatpush1.bf16.msra.mxu0 0
        %352 = vmatprep.subr.bf16.mxu0 0
        %353 = vmatpush1.bf16.msra.mxu0 0
        %354 = vmatprep.subr.bf16.mxu0 0
        %355 = vmatpush1.bf16.msra.mxu0 0
        %356 = vmatprep.subr.bf16.mxu0 0
        %357 = vmatpush1.bf16.msra.mxu0 0
        %358 = vmatprep.subr.bf16.mxu0 0
        %359 = vmatpush1.bf16.msra.mxu0 0
        %360 = vmatprep.subr.bf16.mxu0 0
        %361 = vmatpush1.bf16.msra.mxu0 0
        %362 = vmatprep.subr.bf16.mxu0 0
        %363 = vmatpush1.bf16.msra.mxu0 %v342
        %364 = vmatprep.subr.bf16.mxu0 0
        %365 = vmatpush2.bf16.msra.mxu0 0
        %366 = vmatprep.subr.bf16.mxu0 0
        %367 = vmatpush2.bf16.msra.mxu0 0
        %368 = vmatprep.subr.bf16.mxu0 0
        %369 = vmatpush2.bf16.msra.mxu0 0
        %370 = vmatprep.subr.bf16.mxu0 0
        %371 = vmatpush2.bf16.msra.mxu0 0
        %372 = vmatprep.subr.bf16.mxu0 0
        %373 = vmatpush2.bf16.msra.mxu0 0
        %374 = vmatprep.subr.bf16.mxu0 0
        %375 = vmatpush2.bf16.msra.mxu0 0
        %376 = vmatprep.subr.bf16.mxu0 0
        %377 = vmatpush2.bf16.msra.mxu0 0
        %378 = vmatprep.subr.bf16.mxu0 0
        %379 = vmatpush2.bf16.msra.mxu0 0
        %380 = vmatprep.mubr.bf16.mxu0 0
        %381 = vmatmul.mubr.bf16.gmra.mxu0 %v346
        %v382 = vpop.f32.mrf.mxu0
        %v383 = vadd.f32 %v336, %v382
        %v384 = vpop.f32.mrf.mxu0
        %v385 = vpop.f32.mrf.mxu0
        %v386 = vadd.f32 %v336, %v385
        %v387 = vpop.f32.mrf.mxu0
        %388 = vdwg.mxu0
        %v389 = vmax.f32 %v383, 0.0
        %v390 = vmax.f32 %v386, 0.0
        %v391 = vpack.c.bf16 %v390, %v389
        %v392 = vld [vmem:[%s4] sm:$0xf]
        %v393 = vld [vmem:[%s4 + $0x4] sm:$0xf]
        %v394 = vld [vmem:[%s4 + $0x8] sm:$0xf]
        %v395 = vld [vmem:[%s4 + $0xc] sm:$0xf]
        %v396 = vld [vmem:[%s5] sm:$0x1]
        %v398 = vlaneseq
        %v399 = vshrl.u32 %v398, 7
        %v400 = vsub.s32 0, %v399
        %v401 = vrot.slane %v396, %v400
        %v407 = vunpack.c.l.b16 %v392
        %v408 = vunpack.c.l.b16 %v393
        %v409 = vunpack.c.l.b16 %v394
        %v410 = vunpack.c.l.b16 %v395
        %v411 = vpack.c.b16 %v408, %v407
        %v412 = vpack.c.b16 %v410, %v409
        %vm415 = vcmask 261120
        %v417 = vsel %vm415, %v391, 0
        %419 = vmatprep.subr.bf16.mxu0 0
        %420 = vmatpush1.bf16.msra.mxu0 0
        %421 = vmatprep.subr.bf16.mxu0 0
        %422 = vmatpush1.bf16.msra.mxu0 0
        %423 = vmatprep.subr.bf16.mxu0 0
        %424 = vmatpush1.bf16.msra.mxu0 0
        %425 = vmatprep.subr.bf16.mxu0 0
        %426 = vmatpush1.bf16.msra.mxu0 0
        %427 = vmatprep.subr.bf16.mxu0 0
        %428 = vmatpush1.bf16.msra.mxu0 0
        %429 = vmatprep.subr.bf16.mxu0 0
        %430 = vmatpush1.bf16.msra.mxu0 0
        %431 = vmatprep.subr.bf16.mxu0 0
        %432 = vmatpush1.bf16.msra.mxu0 %v412
        %433 = vmatprep.subr.bf16.mxu0 0
        %434 = vmatpush1.bf16.msra.mxu0 %v411
        %435 = vmatprep.subr.bf16.mxu0 0
        %436 = vmatpush2.bf16.msra.mxu0 0
        %437 = vmatprep.subr.bf16.mxu0 0
        %438 = vmatpush2.bf16.msra.mxu0 0
        %439 = vmatprep.subr.bf16.mxu0 0
        %440 = vmatpush2.bf16.msra.mxu0 0
        %441 = vmatprep.subr.bf16.mxu0 0
        %442 = vmatpush2.bf16.msra.mxu0 0
        %443 = vmatprep.subr.bf16.mxu0 0
        %444 = vmatpush2.bf16.msra.mxu0 0
        %445 = vmatprep.subr.bf16.mxu0 0
        %446 = vmatpush2.bf16.msra.mxu0 0
        %447 = vmatprep.subr.bf16.mxu0 0
        %448 = vmatpush2.bf16.msra.mxu0 0
        %449 = vmatprep.subr.bf16.mxu0 0
        %450 = vmatpush2.bf16.msra.mxu0 0
        %451 = vmatprep.mubr.bf16.mxu0 0
        %452 = vmatmul.mubr.bf16.gmra.mxu0 %v417
        %v453 = vpop.f32.mrf.mxu0
        %v454 = vadd.f32 %v401, %v453
        %v455 = vpop.f32.mrf.mxu0
        %v456 = vpop.f32.mrf.mxu0
        %v457 = vadd.f32 %v401, %v456
        %v458 = vpop.f32.mrf.mxu0
        %459 = vdwg.mxu0
        %v460 = vmax.f32 %v454, 0.0
        %v461 = vmax.f32 %v457, 0.0
        %v462 = vpack.c.bf16 %v461, %v460
        %v463 = vld [vmem:[%s6] sm:$0xf]
        %v464 = vld [vmem:[%s6 + $0x4] sm:$0xf]
        %v465 = vld [vmem:[%s6 + $0x8] sm:$0xf]
        %v466 = vld [vmem:[%s6 + $0xc] sm:$0xf]
        %v467 = vld [vmem:[%s7] sm:$0x1]
        %v469 = vlaneseq
        %v470 = vshrl.u32 %v469, 7
        %v471 = vsub.s32 0, %v470
        %v472 = vrot.slane %v467, %v471
        %v478 = vunpack.c.l.b16 %v463
        %v479 = vunpack.c.l.b16 %v464
        %v480 = vunpack.c.l.b16 %v465
        %v481 = vunpack.c.l.b16 %v466
        %v482 = vpack.c.b16 %v479, %v478
        %v483 = vpack.c.b16 %v481, %v480
        %v487 = vsel %vm415, %v462, 0
        %489 = vmatprep.subr.bf16.mxu0 0
        %490 = vmatpush1.bf16.msra.mxu0 0
        %491 = vmatprep.subr.bf16.mxu0 0
        %492 = vmatpush1.bf16.msra.mxu0 0
        %493 = vmatprep.subr.bf16.mxu0 0
        %494 = vmatpush1.bf16.msra.mxu0 0
        %495 = vmatprep.subr.bf16.mxu0 0
        %496 = vmatpush1.bf16.msra.mxu0 0
        %497 = vmatprep.subr.bf16.mxu0 0
        %498 = vmatpush1.bf16.msra.mxu0 0
        %499 = vmatprep.subr.bf16.mxu0 0
        %500 = vmatpush1.bf16.msra.mxu0 0
        %501 = vmatprep.subr.bf16.mxu0 0
        %502 = vmatpush1.bf16.msra.mxu0 %v483
        %503 = vmatprep.subr.bf16.mxu0 0
        %504 = vmatpush1.bf16.msra.mxu0 %v482
        %505 = vmatprep.subr.bf16.mxu0 0
        %506 = vmatpush2.bf16.msra.mxu0 0
        %507 = vmatprep.subr.bf16.mxu0 0
        %508 = vmatpush2.bf16.msra.mxu0 0
        %509 = vmatprep.subr.bf16.mxu0 0
        %510 = vmatpush2.bf16.msra.mxu0 0
        %511 = vmatprep.subr.bf16.mxu0 0
        %512 = vmatpush2.bf16.msra.mxu0 0
        %513 = vmatprep.subr.bf16.mxu0 0
        %514 = vmatpush2.bf16.msra.mxu0 0
        %515 = vmatprep.subr.bf16.mxu0 0
        %516 = vmatpush2.bf16.msra.mxu0 0
        %517 = vmatprep.subr.bf16.mxu0 0
        %518 = vmatpush2.bf16.msra.mxu0 0
        %519 = vmatprep.subr.bf16.mxu0 0
        %520 = vmatpush2.bf16.msra.mxu0 0
        %521 = vmatprep.mubr.bf16.mxu0 0
        %522 = vmatmul.mubr.bf16.gmra.mxu0 %v487
        %v523 = vpop.f32.mrf.mxu0
        %v524 = vadd.f32 %v472, %v523
        %v525 = vpop.f32.mrf.mxu0
        %v526 = vpop.f32.mrf.mxu0
        %v527 = vadd.f32 %v472, %v526
        %v528 = vpop.f32.mrf.mxu0
        %529 = vdwg.mxu0
        %v530 = vmul.f32 %v524, 1.442695
        %v531 = vpow.pop %v530
        %v532 = vmul.f32 %v527, 1.442695
        %v533 = vpow.pop %v532
        %v534 = vld [vmem:[%s322] sm:$0xff]
        %v535 = vld [vmem:[%s322 + $0x8] sm:$0xff]
        %538 = vrot.lane.b32.xlu0 %v534, 4
        %v539 = vpop.permute.xlu0 %538
        %540 = vrot.lane.b32.xlu0 %v535, 4
        %v541 = vpop.permute.xlu0 %540
        %v544 = vmul.f32 %v531, %v539
        %v545 = vmul.f32 %v533, %v541
        %548 = vrot.lane.b32.xlu0 %v544, 124
        %v549 = vpop.permute.xlu0 %548
        %550 = vrot.lane.b32.xlu0 %v545, 124
        %v551 = vpop.permute.xlu0 %550
        %v554 = vadd.f32 %v524, %v549
        %v555 = vadd.f32 %v527, %v551
        %vm556 = vcmask 31744
        %557 = vst.msk [vmem:[%s311] sm:$0xff] %vm556, %v554
        %558 = vst.msk [vmem:[%s311 + $0x8] sm:$0xff] %vm556, %v555
        %s559 = scalar_lea.vmem %s311, 16 [#allocation2]
        %560 = vst.msk [vmem:[%s559] sm:$0xff] %vm556, %v524
        %561 = vst.msk [vmem:[%s559 + $0x8] sm:$0xff] %vm556, %v527
        %564 = vrot.lane.b32.xlu0 %v524, 124
        %v565 = vpop.permute.xlu0 %564
        %566 = vrot.lane.b32.xlu0 %v527, 124
        %v567 = vpop.permute.xlu0 %566
        %s570 = scalar_lea.vmem %s311, 32 [#allocation2]
        %571 = vst.msk [vmem:[%s570] sm:$0xff] %vm556, %v565
        %572 = vst.msk [vmem:[%s570 + $0x8] sm:$0xff] %vm556, %v567
        %s573 = sand.u32 %s205, 1
        %s574 = sand.u32 %s205, 1
        %s575 = smul.addr %s574, 48
        %s576 = scalar_lea.vmem [#allocation2], %s575
        // Predicated region
        $region53: #{tpu_custom_call.1} parent=51 // pred_check
          %p577 = pneg %p215
        $region54: #{tpu_custom_call.1} parent=51 // pred_check_branch
          %579 = sbr.rel (%p577) target = $region56
        $region55: #{tpu_custom_call.1} parent=51 // pred_region
          %s580 = smul.u32 2, %s19
          %s581 = smul.addr %s580, 8
          %s582 = scalar_lea.vmem %s8, %s581
          // Predicated region
          $region57: #{tpu_custom_call.1} parent=55 // pred_check
            _
          $region58: #{tpu_custom_call.1} parent=55 // pred_check_branch
            %584 = sbr.rel (0) target = $region60
          $region59: #{tpu_custom_call.1} parent=55 // pred_region
            // Predicated region
            $region61: #{tpu_custom_call.1} parent=59 // pred_check
              _
            $region62: #{tpu_custom_call.1} parent=59 // pred_check_branch
              %586 = sbr.rel (0) target = $region64
            $region63: #{tpu_custom_call.1} parent=59 // pred_region
              // Predicated region
              $region76: #{tpu_custom_call.1} parent=63 // pred_check
                _
              $region77: #{tpu_custom_call.1} parent=63 // pred_check_branch
                %612 = sbr.rel (0) target = $region79
              $region78: #{tpu_custom_call.1} parent=63 // pred_region
                loop: start=0, step=1, limit=1
                $region80: #{tpu_custom_call.1} parent=78 // loop_pre_header
                  _
                $region81: #{tpu_custom_call.1} parent=78 // loop_header
                  %s614 = sphi 0, %s618
                  %p615 = scmp.ge.s32.totalorder %s614, 1
                  %s619 = sphi %s576, %s576
                  %s620 = sphi %s582, %s582
                $region82: #{tpu_custom_call.1} parent=78 // loop_header_branch
                  %617 = sbr.rel (%p615) target = $region86
                $region83: #{tpu_custom_call.1} parent=78 // loop_body
                  %v621 = vld [vmem:[%s619] sm:$0xff]
                  %622 = vst [vmem:[%s620] sm:$0xff] %v621
                  %v623 = vld [vmem:[%s619 + $0x8] sm:$0xff]
                  %624 = vst [vmem:[%s620 + $0x8] sm:$0xff] %v623
                  %v625 = vld [vmem:[%s619 + $0x10] sm:$0xff]
                  %626 = vst [vmem:[%s620 + $0x20] sm:$0xff] %v625
                  %v627 = vld [vmem:[%s619 + $0x18] sm:$0xff]
                  %628 = vst [vmem:[%s620 + $0x28] sm:$0xff] %v627
                  %v629 = vld [vmem:[%s619 + $0x20] sm:$0xff]
                  %630 = vst [vmem:[%s620 + $0x40] sm:$0xff] %v629
                  %v631 = vld [vmem:[%s619 + $0x28] sm:$0xff]
                  %632 = vst [vmem:[%s620 + $0x48] sm:$0xff] %v631
                $region84: #{tpu_custom_call.1} parent=78 // loop_footer
                  %s618 = sadd.s32 1, %s614
                $region85: #{tpu_custom_call.1} parent=78 // loop_footer_branch
                  %613 = sbr.rel target = $region81
                $region86: #{tpu_custom_call.1} parent=78 // loop_exit
                  _
              $region79: #{tpu_custom_call.1} parent=63 // pred_fallthru
                _
              // Predicated region
              $region87: #{tpu_custom_call.1} parent=63 // pred_check
                _
              $region88: #{tpu_custom_call.1} parent=63 // pred_check_branch
                %634 = sbr.rel target = $region90
              $region89: #{tpu_custom_call.1} parent=63 // pred_region
                _
              $region90: #{tpu_custom_call.1} parent=63 // pred_fallthru
                _
            $region64: #{tpu_custom_call.1} parent=59 // pred_fallthru
              _
            // Predicated region
            $region65: #{tpu_custom_call.1} parent=59 // pred_check
              _
            $region66: #{tpu_custom_call.1} parent=59 // pred_check_branch
              %588 = sbr.rel target = $region68
            $region67: #{tpu_custom_call.1} parent=59 // pred_region
              %s590 = ssub.s32 256, 1
              loop: start=0, step=1, limit=1
              $region69: #{tpu_custom_call.1} parent=67 // loop_pre_header
                _
              $region70: #{tpu_custom_call.1} parent=67 // loop_header
                %s592 = sphi 0, %s596
                %p593 = scmp.ge.s32.totalorder %s592, 1
                %s597 = sphi %s576, %s576
                %s598 = sphi %s582, %s582
              $region71: #{tpu_custom_call.1} parent=67 // loop_header_branch
                %595 = sbr.rel (%p593) target = $region75
              $region72: #{tpu_custom_call.1} parent=67 // loop_body
                %v599 = vld [vmem:[%s597] sm:%s590]
                %600 = vst [vmem:[%s598] sm:%s590] %v599
                %v601 = vld [vmem:[%s597 + $0x8] sm:%s590]
                %602 = vst [vmem:[%s598 + $0x8] sm:%s590] %v601
                %v603 = vld [vmem:[%s597 + $0x10] sm:%s590]
                %604 = vst [vmem:[%s598 + $0x20] sm:%s590] %v603
                %v605 = vld [vmem:[%s597 + $0x18] sm:%s590]
                %606 = vst [vmem:[%s598 + $0x28] sm:%s590] %v605
                %v607 = vld [vmem:[%s597 + $0x20] sm:%s590]
                %608 = vst [vmem:[%s598 + $0x40] sm:%s590] %v607
                %v609 = vld [vmem:[%s597 + $0x28] sm:%s590]
                %610 = vst [vmem:[%s598 + $0x48] sm:%s590] %v609
              $region73: #{tpu_custom_call.1} parent=67 // loop_footer
                %s596 = sadd.s32 1, %s592
              $region74: #{tpu_custom_call.1} parent=67 // loop_footer_branch
                %591 = sbr.rel target = $region70
              $region75: #{tpu_custom_call.1} parent=67 // loop_exit
                _
            $region68: #{tpu_custom_call.1} parent=59 // pred_fallthru
              _
          $region60: #{tpu_custom_call.1} parent=55 // pred_fallthru
            _
          %635 = vnop
        $region56: #{tpu_custom_call.1} parent=51 // pred_fallthru
          _
      $region52: #{tpu_custom_call.1} parent=5 // pred_fallthru
        _
      %p636 = scmp.le.s32.totalorder 2, %s14
      // Predicated region
      $region91: #{tpu_custom_call.1} parent=5 // pred_check
        %p637 = pneg %p636
      $region92: #{tpu_custom_call.1} parent=5 // pred_check_branch
        %639 = sbr.rel (%p637) target = $region94
      $region93: #{tpu_custom_call.1} parent=5 // pred_region
        %s640 = ssub.s32 %s14, 2
        // Predicated region
        $region95: #{tpu_custom_call.1} parent=93 // pred_check
          %p641 = pneg %p221
        $region96: #{tpu_custom_call.1} parent=93 // pred_check_branch
          %643 = sbr.rel (%p641) target = $region98
        $region97: #{tpu_custom_call.1} parent=93 // pred_region
          %s644 = sand.u32 %s206, 1
          %s645 = sand.u32 %s206, 1
          %s646 = smul.addr %s645, 48
          %s647 = scalar_lea.vmem [#allocation2], %s646
        $region98: #{tpu_custom_call.1} parent=93 // pred_fallthru
          _
      $region94: #{tpu_custom_call.1} parent=5 // pred_fallthru
        _
    $region6: #{tpu_custom_call.1} parent=1 // loop_footer
      %s18 = sadd.s32 1, %s14
    $region7: #{tpu_custom_call.1} parent=1 // loop_footer_branch
      %13 = sbr.rel target = $region3
    $region8: #{tpu_custom_call.1} parent=1 // loop_exit
      _

</llo_original>
